<compile_context>
chip_gen: v6e
topology: v6e:2x2x1
jax: 0.10.0
libtpu: 0.0.40
codegen_flags: <defaults>
</compile_context>

<pallas_src>
import numpy as np
import jax
import jax.numpy as jnp
from jax import lax
from jax.experimental import pallas as pl
from jax.experimental.pallas import tpu as pltpu


def _series_decomp_kernel(avg_ref, x_ref, xs_ref, xt_ref):
    """One batch tile (TB batch elements) per grid step.

    avg_ref: (L, L)      VMEM  constant banded averaging matrix (f32), resident
    x_ref  : (TB, L, C)  VMEM  input block, time-major
    xs_ref : (TB, L, C)  VMEM  seasonal part  x - x_t
    xt_ref : (TB, C, L)  VMEM  trend, channels-first (matching the reference)
    """
    avg = avg_ref[...]                          # (L, L), single resident copy
    tb = x_ref.shape[0]
    for b in range(tb):                         # static unroll over the batch tile
        xb = x_ref[b].astype(jnp.float32)       # (L, C)
        # MXU: trend_cl[c, t] = sum_s avg[t, s] * x[s, c].  Contracting x's
        # time axis directly folds the channels-first transpose into the MXU
        # operand feed (no XLU transpose); HIGHEST precision keeps f32
        # accuracy and is free here (kernel is mem/step-overhead bound).
        trend_cl = lax.dot_general(
            xb, avg,
            dimension_numbers=(((0,), (1,)), ((), ())),
            preferred_element_type=jnp.float32,
            precision=lax.Precision.HIGHEST,
        )                                       # (C, L)
        xt_ref[b] = trend_cl.astype(xt_ref.dtype)
        # Bug-compatible: x (L, C) minus x_t (C, L); with L == C this is an
        # elementwise subtraction (identical shapes).
        xs_ref[b] = (xb - trend_cl).astype(xs_ref.dtype)


def _averaging_matrix(L, kernel_size):
    """(L, L) f32 matrix A with trend = A @ x (time-major).

    A[t, s] = #{ j in [0, K) : clip(t + j - pad, 0, L-1) == s } / K, so the
    replicate padding appears as extra weight on the first/last columns.
    Built with host numpy (no (L, K, L) one-hot intermediate on device).
    """
    pad = (kernel_size - 1) // 2
    src = np.clip(
        np.arange(L)[:, None] + np.arange(kernel_size)[None, :] - pad, 0, L - 1
    )                                           # (L, K) source index per tap
    a = np.zeros((L, L), dtype=np.float32)
    rows = np.repeat(np.arange(L), kernel_size)
    np.add.at(a, (rows, src.ravel()), 1.0 / kernel_size)
    return jnp.asarray(a)


def _pick_batch_tile(B):
    """Largest TB <= 8 that divides B and leaves >= 2 grid steps (v7x megacore)."""
    tb = min(8, B)
    while tb > 1 and (B % tb != 0 or B // tb < 2):
        tb -= 1
    return max(tb, 1)


def _vmem_limit_bytes(est_bytes):
    """Scoped-VMEM limit scaled with the problem, with headroom below physical
    capacity (~48 MiB ceiling on v7x, ~96 MiB on v5e/v6e)."""
    try:
        cap = int(getattr(pltpu.get_tpu_info(), "vmem_capacity_bytes",
                          64 * 1024 * 1024))
    except Exception:
        cap = 64 * 1024 * 1024
    ceiling = (cap * 3) // 4                    # leave ~25% for Mosaic scratch
    return int(min(max(2 * est_bytes, 32 * 1024 * 1024), ceiling))


def series_decomp(x, kernel_size):
    """x: (B, L, C).  Returns (x_s, x_t) with shapes (B, L, C) and (B, C, L)."""
    B, L, C = x.shape
    assert kernel_size % 2 == 1, "use an odd kernel_size (stride-1 'same' average)"
    # Reference's `x - x_t` mixes (B, L, C) with (B, C, L); only valid if L == C.
    assert L == C, "reference semantics (missing permute-back) require L == C"

    avg_mat = _averaging_matrix(L, kernel_size)
    tb = _pick_batch_tile(B)

    itemsize = jnp.dtype(x.dtype).itemsize
    est = (L * L * 4                            # resident averaging matrix (1 buf)
           + 2 * tb * L * C * itemsize          # double-buffered input
           + 4 * tb * L * C * itemsize          # two double-buffered outputs
           + 4 * L * C * 4)                     # in-kernel f32 temporaries
    vmem_limit = _vmem_limit_bytes(est)

    out_shape = (
        jax.ShapeDtypeStruct((B, L, C), x.dtype),   # x_s
        jax.ShapeDtypeStruct((B, C, L), x.dtype),   # x_t (channels-first, as in ref)
    )

    return pl.pallas_call(
        _series_decomp_kernel,
        out_shape=out_shape,
        grid=(pl.cdiv(B, tb),),
        in_specs=[
            # Whole averaging matrix resident in VMEM for the entire grid:
            # single buffer, DMA'd once (no double-buffering of a constant).
            pl.BlockSpec(memory_space=pltpu.MemorySpace.VMEM),
            pl.BlockSpec((tb, L, C), lambda i: (i, 0, 0)),
        ],
        out_specs=(
            pl.BlockSpec((tb, L, C), lambda i: (i, 0, 0)),
            pl.BlockSpec((tb, C, L), lambda i: (i, 0, 0)),
        ),
        compiler_params=pltpu.CompilerParams(
            dimension_semantics=("parallel",),
            vmem_limit_bytes=vmem_limit,
        ),
    )(avg_mat, x)


def _reference(x, kernel_size):
    """Pure-JAX replica of the PyTorch code (including the missing permute-back)."""
    pad = (kernel_size - 1) // 2
    front = jnp.repeat(x[:, 0:1, :], pad, axis=1)
    end = jnp.repeat(x[:, -1:, :], pad, axis=1)
    xp = jnp.concatenate([front, x, end], axis=1)      # (B, L+2p, C)
    xp = jnp.transpose(xp, (0, 2, 1))                  # (B, C, L+2p)
    L = x.shape[1]
    windows = jnp.stack([xp[:, :, j:j + L] for j in range(kernel_size)], axis=0)
    x_t = jnp.mean(windows, axis=0)                    # (B, C, L) -- no permute back
    x_s = x - x_t                                      # broadcasting as in PyTorch
    return x_s, x_t


def _check(B, L, C, kernel_size, key, atol=1e-4, rtol=1e-4):
    x = jax.random.normal(key, (B, L, C), dtype=jnp.float32)
    x_s, x_t = series_decomp(x, kernel_size)
    jax.block_until_ready((x_s, x_t))
    ref_s, ref_t = _reference(x, kernel_size)
    assert x_s.shape == (B, L, C) and x_t.shape == (B, C, L)
    assert jnp.allclose(x_t, ref_t, atol=atol, rtol=rtol), "x_t mismatch"
    assert jnp.allclose(x_s, ref_s, atol=atol, rtol=rtol), "x_s mismatch"


if __name__ == "__main__":
    key = jax.random.PRNGKey(0)
    k1, k2 = jax.random.split(key)
    # Small smoke test (sub-lane-width output; not a perf target by design).
    _check(B=4, L=16, C=16, kernel_size=5, key=k1)
    # Autoformer-like kernel size, lane-dense, batch-tiled (TB=4 -> 2 grid steps).
    _check(B=8, L=128, C=128, kernel_size=25, key=k2)
    print("KERNEL_OK")
</pallas_src>

<mosaic_0001>
module attributes {stable_mosaic.version = 11 : i64} {
  func.func @_series_decomp_kernel(%arg0: i32, %arg1: memref<16x16xf32, #tpu.memory_space<vmem>>, %arg2: memref<2x16x16xf32, #tpu.memory_space<vmem>>, %arg3: memref<2x16x16xf32, #tpu.memory_space<vmem>>, %arg4: memref<2x16x16xf32, #tpu.memory_space<vmem>>) attributes {dimension_semantics = [#tpu.dimension_semantics<parallel>], iteration_bounds = array<i64: 2>, scalar_prefetch = 0 : i64, scratch_operands = 0 : i64, tpu.core_type = #tpu.core_type<tc>, window_params = [{pipeline_mode = #tpu.pipeline_mode<synchronous>, transform_indices = @transform_0, window_bounds = array<i64: 16, 16>}, {transform_indices = @transform_1, window_bounds = array<i64: 2, 16, 16>}, {transform_indices = @transform_2, window_bounds = array<i64: 2, 16, 16>}, {transform_indices = @transform_3, window_bounds = array<i64: 2, 16, 16>}]} {
    %c0 = arith.constant 0 : index
    %c0_0 = arith.constant 0 : index
    %0 = vector.load %arg1[%c0, %c0_0] : memref<16x16xf32, #tpu.memory_space<vmem>>, vector<16x16xf32>
    %c0_1 = arith.constant 0 : index
    %c0_2 = arith.constant 0 : index
    %c0_3 = arith.constant 0 : index
    %1 = vector.load %arg2[%c0_1, %c0_2, %c0_3] : memref<2x16x16xf32, #tpu.memory_space<vmem>>, vector<1x16x16xf32>
    %2 = vector.shape_cast %1 : vector<1x16x16xf32> to vector<16x16xf32>
    %cst = arith.constant dense<0.000000e+00> : vector<16x16xf32>
    %3 = tpu.matmul %2, %0, %cst {dimension_numbers = #tpu.dot_dimension_numbers<[0], [1], [1], [0], [0, 1, 1, 0], [], []>, precision = #tpu.contract_precision<fp32>} : vector<16x16xf32>, vector<16x16xf32>, vector<16x16xf32> -> vector<16x16xf32>
    %c0_4 = arith.constant 0 : index
    %c0_5 = arith.constant 0 : index
    %c0_6 = arith.constant 0 : index
    %4 = vector.load %arg4[%c0_4, %c0_5, %c0_6] : memref<2x16x16xf32, #tpu.memory_space<vmem>>, vector<1x16x16xf32>
    %5 = vector.shape_cast %4 : vector<1x16x16xf32> to vector<16x16xf32>
    %6 = vector.shape_cast %3 : vector<16x16xf32> to vector<1x16x16xf32>
    tpu.vector_store %arg4[%c0_4, %c0_5, %c0_6], %6 {strides = array<i32>} : memref<2x16x16xf32, #tpu.memory_space<vmem>>, vector<1x16x16xf32>,
    %7 = arith.subf %2, %3 : vector<16x16xf32>
    %c0_7 = arith.constant 0 : index
    %c0_8 = arith.constant 0 : index
    %c0_9 = arith.constant 0 : index
    %8 = vector.load %arg3[%c0_7, %c0_8, %c0_9] : memref<2x16x16xf32, #tpu.memory_space<vmem>>, vector<1x16x16xf32>
    %9 = vector.shape_cast %8 : vector<1x16x16xf32> to vector<16x16xf32>
    %10 = vector.shape_cast %7 : vector<16x16xf32> to vector<1x16x16xf32>
    tpu.vector_store %arg3[%c0_7, %c0_8, %c0_9], %10 {strides = array<i32>} : memref<2x16x16xf32, #tpu.memory_space<vmem>>, vector<1x16x16xf32>,
    %c1 = arith.constant 1 : index
    %c0_10 = arith.constant 0 : index
    %c0_11 = arith.constant 0 : index
    %11 = vector.load %arg2[%c1, %c0_10, %c0_11] : memref<2x16x16xf32, #tpu.memory_space<vmem>>, vector<1x16x16xf32>
    %12 = vector.shape_cast %11 : vector<1x16x16xf32> to vector<16x16xf32>
    %cst_12 = arith.constant dense<0.000000e+00> : vector<16x16xf32>
    %13 = tpu.matmul %12, %0, %cst_12 {dimension_numbers = #tpu.dot_dimension_numbers<[0], [1], [1], [0], [0, 1, 1, 0], [], []>, precision = #tpu.contract_precision<fp32>} : vector<16x16xf32>, vector<16x16xf32>, vector<16x16xf32> -> vector<16x16xf32>
    %c1_13 = arith.constant 1 : index
    %c0_14 = arith.constant 0 : index
    %c0_15 = arith.constant 0 : index
    %14 = vector.load %arg4[%c1_13, %c0_14, %c0_15] : memref<2x16x16xf32, #tpu.memory_space<vmem>>, vector<1x16x16xf32>
    %15 = vector.shape_cast %14 : vector<1x16x16xf32> to vector<16x16xf32>
    %16 = vector.shape_cast %13 : vector<16x16xf32> to vector<1x16x16xf32>
    tpu.vector_store %arg4[%c1_13, %c0_14, %c0_15], %16 {strides = array<i32>} : memref<2x16x16xf32, #tpu.memory_space<vmem>>, vector<1x16x16xf32>,
    %17 = arith.subf %12, %13 : vector<16x16xf32>
    %c1_16 = arith.constant 1 : index
    %c0_17 = arith.constant 0 : index
    %c0_18 = arith.constant 0 : index
    %18 = vector.load %arg3[%c1_16, %c0_17, %c0_18] : memref<2x16x16xf32, #tpu.memory_space<vmem>>, vector<1x16x16xf32>
    %19 = vector.shape_cast %18 : vector<1x16x16xf32> to vector<16x16xf32>
    %20 = vector.shape_cast %17 : vector<16x16xf32> to vector<1x16x16xf32>
    tpu.vector_store %arg3[%c1_16, %c0_17, %c0_18], %20 {strides = array<i32>} : memref<2x16x16xf32, #tpu.memory_space<vmem>>, vector<1x16x16xf32>,
    return
  }
  func.func @transform_0(%arg0: i32) -> (i32, i32) {
    %c0_i32 = arith.constant 0 : i32
    %c0_i32_0 = arith.constant 0 : i32
    %c0_i32_1 = arith.constant 0 : i32
    return %c0_i32, %c0_i32_0 : i32, i32
  }
  func.func @transform_1(%arg0: i32) -> (i32, i32, i32) {
    %c0_i32 = arith.constant 0 : i32
    %c0_i32_0 = arith.constant 0 : i32
    %c0_i32_1 = arith.constant 0 : i32
    return %arg0, %c0_i32, %c0_i32_0 : i32, i32, i32
  }
  func.func @transform_2(%arg0: i32) -> (i32, i32, i32) {
    %c0_i32 = arith.constant 0 : i32
    %c0_i32_0 = arith.constant 0 : i32
    %c0_i32_1 = arith.constant 0 : i32
    return %arg0, %c0_i32, %c0_i32_0 : i32, i32, i32
  }
  func.func @transform_3(%arg0: i32) -> (i32, i32, i32) {
    %c0_i32 = arith.constant 0 : i32
    %c0_i32_0 = arith.constant 0 : i32
    %c0_i32_1 = arith.constant 0 : i32
    return %arg0, %c0_i32, %c0_i32_0 : i32, i32, i32
  }
}

</mosaic_0001>

<llo_original>
// kernel: tpu_custom_call.1
$region0: #{tpu_custom_call.1}
  #allocation0 [shape = 'u32[]', space=smem, size = 0x4, offset = 0x4, fixed_abs, tag = 'smem constant byte address 0x4 - core index']
  #allocation1 [shape = 'u32[144,128]{1,0:T(1,128)}', space=vmem, size = 0x12000, scoped, tag = 'internal scratch']
  %s0 = inlined_call_operand.hbm [shape: f32[16,16], index: 0, kind: input, shape index: {}]
  %s1 = inlined_call_operand.hbm [shape: f32[4,16,16], index: 1, kind: input, shape index: {}]
  %s2 = inlined_call_operand.hbm [shape: f32[4,16,16], index: 2, kind: output, shape index: {0}]
  %s3 = inlined_call_operand.hbm [shape: f32[4,16,16], index: 3, kind: output, shape index: {1}]
  %4 = xla_tuple %s2, %s3
  %s5 = sld [smem:[#allocation0]]
  $region57: #{tpu_custom_call.1} parent=0
    _
  %s7 = ssub.s32 1, %s5
  %s8 = scalar_select 0, %s7, %s5
  $region1: #{tpu_custom_call.1} parent=0
    #allocation2 [shape = 'u8[8192]{0}', space=vmem, size = 0x2000, scoped, tag = 'input window, operand 0, single buffered']
    #allocation3 [shape = 's32[2]{0}', space=sflag, size = 0x8, scoped, tag = 'scoped memory for tpu_custom_call.1']
    #allocation4 [shape = 's32[2]{0}', space=sflag, size = 0x8, scoped, tag = 'scoped memory for tpu_custom_call.1']
    #allocation5 [shape = 'u8[32768]{0}', space=vmem, size = 0x8000, scoped, tag = 'input window, operand 1']
    #allocation6 [shape = 's32[2]{0}', space=sflag, size = 0x8, scoped, tag = 'scoped memory for tpu_custom_call.1']
    #allocation7 [shape = 'u8[32768]{0}', space=vmem, size = 0x8000, scoped, tag = 'output window, operand 0']
    #allocation8 [shape = 'u8[32768]{0}', space=vmem, size = 0x8000, scoped, tag = 'output window, operand 1']
    #allocation9 [shape = 's32[2]{0}', space=sflag, size = 0x8, scoped, tag = 'scoped memory for tpu_custom_call.1']
    %9 = vsyncpa [#allocation3], 0
    %10 = vsyncpa [#allocation6], 0
    %s11 = scalar_lea.sflag [#allocation6], 1
    %12 = vsyncpa %s11, 0
    %13 = vsyncpa [#allocation4], 0
    %s14 = scalar_lea.sflag [#allocation4], 1
    %15 = vsyncpa %s14, 0
    %16 = vsyncpa [#allocation9], 0
    %s17 = scalar_lea.sflag [#allocation9], 1
    %18 = vsyncpa %s17, 0
    loop: start=0, step=1, limit=4
    $region2: #{tpu_custom_call.1} parent=1 // loop_pre_header
      _
    $region3: #{tpu_custom_call.1} parent=1 // loop_header
      %s20 = sphi 0, %s24
      %p21 = scmp.ge.s32.totalorder %s20, 4
      %s28 = sphi 0, %s28
      %s30 = sphi 0, %s28
      %s31 = sphi 0, %s30
      %s45 = sphi 0, %s31
      %s51 = sphi 0, %s53
      %s54 = sphi 0, %s51
      %s55 = sphi 0, %s54
      %s71 = sphi 0, %s55
      %s77 = sphi 0, %s79
      %s80 = sphi 0, %s77
      %s81 = sphi 0, %s80
      %s97 = sphi 0, %s81
      %s103 = sphi 0, %s105
      %s106 = sphi 0, %s103
      %s107 = sphi 0, %s106
      %s123 = sphi 0, %s107
    $region4: #{tpu_custom_call.1} parent=1 // loop_header_branch
      %23 = sbr.rel (%p21) target = $region8
    $region5: #{tpu_custom_call.1} parent=1 // loop_body
      %s25 = ssub.s32 %s20, 1
      %s26 = ssub.s32 %s20, 2
      %s27 = sadd.s32 %s20, 1
      %s29 = sadd.s32 %s28, 1
      %p32 = scmp.eq.s32.totalorder %s20, 1
      %p33 = scmp.ne.s32.totalorder %s28, %s30
      %p34 = scmp.eq.s32.totalorder %s20, 0
      %p35 = por %p33, %p34
      %p36 = scmp.ne.s32.totalorder %s28, %s30
      %p37 = scmp.eq.s32.totalorder %s25, 1
      %p38 = por %p36, %p37
      %p39 = scmp.ne.s32.totalorder %s30, %s31
      %p40 = scmp.eq.s32.totalorder %s25, 0
      %p41 = por %p39, %p40
      %p42 = scmp.ne.s32.totalorder %s30, %s31
      %p43 = scmp.eq.s32.totalorder %s26, 1
      %p44 = por %p42, %p43
      %p46 = scmp.ne.s32.totalorder %s31, %s45
      %p47 = scmp.eq.s32.totalorder %s26, 0
      %p48 = por %p46, %p47
      %s49 = ssub.s32 %s20, %s27
      %p50 = scmp.eq.s32.totalorder %s49, 0
      %s52 = sadd.s32 %s51, 1
      %s53 = scalar_select %p50, %s51, %s52
      %p56 = pneg %p50
      %p57 = scmp.eq.s32.totalorder %s20, 1
      %p58 = por %p56, %p57
      %p59 = scmp.ne.s32.totalorder %s51, %s54
      %p60 = scmp.eq.s32.totalorder %s20, 0
      %p61 = por %p59, %p60
      %p62 = scmp.ne.s32.totalorder %s51, %s54
      %p63 = scmp.eq.s32.totalorder %s25, 1
      %p64 = por %p62, %p63
      %p65 = scmp.ne.s32.totalorder %s54, %s55
      %p66 = scmp.eq.s32.totalorder %s25, 0
      %p67 = por %p65, %p66
      %p68 = scmp.ne.s32.totalorder %s54, %s55
      %p69 = scmp.eq.s32.totalorder %s26, 1
      %p70 = por %p68, %p69
      %p72 = scmp.ne.s32.totalorder %s55, %s71
      %p73 = scmp.eq.s32.totalorder %s26, 0
      %p74 = por %p72, %p73
      %s75 = ssub.s32 %s20, %s27
      %p76 = scmp.eq.s32.totalorder %s75, 0
      %s78 = sadd.s32 %s77, 1
      %s79 = scalar_select %p76, %s77, %s78
      %p82 = pneg %p76
      %p83 = scmp.eq.s32.totalorder %s20, 1
      %p84 = por %p82, %p83
      %p85 = scmp.ne.s32.totalorder %s77, %s80
      %p86 = scmp.eq.s32.totalorder %s20, 0
      %p87 = por %p85, %p86
      %p88 = scmp.ne.s32.totalorder %s77, %s80
      %p89 = scmp.eq.s32.totalorder %s25, 1
      %p90 = por %p88, %p89
      %p91 = scmp.ne.s32.totalorder %s80, %s81
      %p92 = scmp.eq.s32.totalorder %s25, 0
      %p93 = por %p91, %p92
      %p94 = scmp.ne.s32.totalorder %s80, %s81
      %p95 = scmp.eq.s32.totalorder %s26, 1
      %p96 = por %p94, %p95
      %p98 = scmp.ne.s32.totalorder %s81, %s97
      %p99 = scmp.eq.s32.totalorder %s26, 0
      %p100 = por %p98, %p99
      %s101 = ssub.s32 %s20, %s27
      %p102 = scmp.eq.s32.totalorder %s101, 0
      %s104 = sadd.s32 %s103, 1
      %s105 = scalar_select %p102, %s103, %s104
      %p108 = pneg %p102
      %p109 = scmp.eq.s32.totalorder %s20, 1
      %p110 = por %p108, %p109
      %p111 = scmp.ne.s32.totalorder %s103, %s106
      %p112 = scmp.eq.s32.totalorder %s20, 0
      %p113 = por %p111, %p112
      %p114 = scmp.ne.s32.totalorder %s103, %s106
      %p115 = scmp.eq.s32.totalorder %s25, 1
      %p116 = por %p114, %p115
      %p117 = scmp.ne.s32.totalorder %s106, %s107
      %p118 = scmp.eq.s32.totalorder %s25, 0
      %p119 = por %p117, %p118
      %p120 = scmp.ne.s32.totalorder %s106, %s107
      %p121 = scmp.eq.s32.totalorder %s26, 1
      %p122 = por %p120, %p121
      %p124 = scmp.ne.s32.totalorder %s107, %s123
      %p125 = scmp.eq.s32.totalorder %s26, 0
      %p126 = por %p124, %p125
      %p127 = scmp.le.s32.totalorder 1, %s20
      %p128 = scmp.lt.s32.totalorder %s20, 3
      %p129 = pnand %p127, %p128
      %p130 = pneg %p129
      // Predicated region
      $region9: #{tpu_custom_call.1} parent=5 // pred_check
        _
      $region10: #{tpu_custom_call.1} parent=5 // pred_check_branch
        %132 = sbr.rel (%p129) target = $region12
      $region11: #{tpu_custom_call.1} parent=5 // pred_region
        %s133 = ssub.s32 %s20, 1
        // Predicated region
        $region13: #{tpu_custom_call.1} parent=11 // pred_check
          %p134 = pneg %p41
        $region14: #{tpu_custom_call.1} parent=11 // pred_check_branch
          %136 = sbr.rel (%p134) target = $region16
        $region15: #{tpu_custom_call.1} parent=11 // pred_region
          %s138 = ssub.s32 256, 256
          %139 = vsyncadd [#allocation3], %s138
          %s140 = sshll.u32 [#allocation2], 4
          %s141 = int_to_ptr.vmem [resolvable:$true] %s140
          %146 = dma.hbm_to_vmem [thread:$0]  %s0, 256, %s141, [#allocation3], 128, 128, 8
        $region16: #{tpu_custom_call.1} parent=11 // pred_fallthru
          _
      $region12: #{tpu_custom_call.1} parent=5 // pred_fallthru
        _
      %p147 = scmp.lt.s32.totalorder %s20, 2
      // Predicated region
      $region17: #{tpu_custom_call.1} parent=5 // pred_check
        %p148 = pneg %p147
      $region18: #{tpu_custom_call.1} parent=5 // pred_check_branch
        %150 = sbr.rel (%p148) target = $region20
      $region19: #{tpu_custom_call.1} parent=5 // pred_region
        // Predicated region
        $region21: #{tpu_custom_call.1} parent=19 // pred_check
          %p151 = pneg %p61
        $region22: #{tpu_custom_call.1} parent=19 // pred_check_branch
          %153 = sbr.rel (%p151) target = $region24
        $region23: #{tpu_custom_call.1} parent=19 // pred_region
          %s154 = sand.u32 %s51, 1
          %s155 = scalar_lea.sflag [#allocation6], %s154
          %s156 = sand.u32 %s51, 1
          %s157 = smul.addr %s156, 32
          %s158 = scalar_lea.vmem [#allocation5], %s157
          %s159 = smul.u32 2, %s20
          %s161 = ssub.s32 512, 512
          %162 = vsyncadd %s155, %s161
          %s163 = smul.addr %s159, 2
          %s164 = smul.addr %s163, 128
          %s165 = scalar_lea.hbm %s1, %s164
          %s166 = sshll.u32 %s158, 4
          %s167 = int_to_ptr.vmem [resolvable:$true] %s166
          %172 = dma.hbm_to_vmem [thread:$0]  %s165, 512, %s167, %s155, 128, 128, 8
        $region24: #{tpu_custom_call.1} parent=19 // pred_fallthru
          _
      $region20: #{tpu_custom_call.1} parent=5 // pred_fallthru
        _
      %p173 = scmp.le.s32.totalorder 1, %s20
      %p174 = scmp.lt.s32.totalorder %s20, 3
      %p175 = pnand %p173, %p174
      %p176 = pneg %p175
      // Predicated region
      $region25: #{tpu_custom_call.1} parent=5 // pred_check
        _
      $region26: #{tpu_custom_call.1} parent=5 // pred_check_branch
        %178 = sbr.rel (%p175) target = $region28
      $region27: #{tpu_custom_call.1} parent=5 // pred_region
        %s179 = ssub.s32 %s20, 1
        // Predicated region
        $region29: #{tpu_custom_call.1} parent=27 // pred_check
          %p180 = pneg %p41
        $region30: #{tpu_custom_call.1} parent=27 // pred_check_branch
          %182 = sbr.rel (%p180) target = $region32
        $region31: #{tpu_custom_call.1} parent=27 // pred_region
          %183 = dma.done [#allocation3], 256
        $region32: #{tpu_custom_call.1} parent=27 // pred_fallthru
          _
        %s184 = sand.u32 %s54, 1
        %s185 = scalar_lea.sflag [#allocation6], %s184
        %s186 = sand.u32 %s54, 1
        %s187 = smul.addr %s186, 32
        %s188 = scalar_lea.vmem [#allocation5], %s187
        // Predicated region
        $region33: #{tpu_custom_call.1} parent=27 // pred_check
          %p189 = pneg %p67
        $region34: #{tpu_custom_call.1} parent=27 // pred_check_branch
          %191 = sbr.rel (%p189) target = $region36
        $region35: #{tpu_custom_call.1} parent=27 // pred_region
          %192 = dma.done %s185, 512
        $region36: #{tpu_custom_call.1} parent=27 // pred_fallthru
          _
        %p193 = pneg %p41
        %p194 = pneg %p38
        %s195 = sand.u32 %s54, 1
        %s196 = scalar_lea.sflag [#allocation6], %s195
        %s197 = sand.u32 %s54, 1
        %s198 = smul.addr %s197, 32
        %s199 = scalar_lea.vmem [#allocation5], %s198
        %p200 = pneg %p67
        %p201 = pneg %p64
        %p202 = pneg %p93
        %p203 = pneg %p90
        %s204 = sand.u32 %s80, 1
        %s205 = scalar_lea.sflag [#allocation4], %s204
        %s206 = sand.u32 %s80, 1
        %s207 = smul.addr %s206, 32
        %s208 = scalar_lea.vmem [#allocation7], %s207
        %p209 = pneg %p119
        %p210 = pneg %p116
        %s211 = sand.u32 %s106, 1
        %s212 = scalar_lea.sflag [#allocation9], %s211
        %s213 = sand.u32 %s106, 1
        %s214 = smul.addr %s213, 32
        %s215 = scalar_lea.vmem [#allocation8], %s214
        %s216 = smul.u32 2, %s25
        %s217 = smul.u32 2, %s25
        %s218 = smul.u32 2, %s25
        %v219 = vld [vmem:[#allocation2] sm:$0xff]
        %v220 = vld [vmem:[#allocation2 + $0x8] sm:$0xff]
        %v221 = vld [vmem:[%s188] sm:$0xff]
        %v222 = vld [vmem:[%s188 + $0x8] sm:$0xff]
        %223 = vxpose.xlu0.b32.start [1/16] %v221, 128
        %224 = vxpose.xlu0.b32.cont [2/16] %v222, 128
        %225 = vxpose.xlu0.b32.cont [3/16] 0.0, 128
        %226 = vxpose.xlu0.b32.cont [4/16] 0.0, 128
        %227 = vxpose.xlu0.b32.cont [5/16] 0.0, 128
        %228 = vxpose.xlu0.b32.cont [6/16] 0.0, 128
        %229 = vxpose.xlu0.b32.cont [7/16] 0.0, 128
        %230 = vxpose.xlu0.b32.cont [8/16] 0.0, 128
        %231 = vxpose.xlu0.b32.cont [9/16] 0.0, 128
        %232 = vxpose.xlu0.b32.cont [10/16] 0.0, 128
        %233 = vxpose.xlu0.b32.cont [11/16] 0.0, 128
        %234 = vxpose.xlu0.b32.cont [12/16] 0.0, 128
        %235 = vxpose.xlu0.b32.cont [13/16] 0.0, 128
        %236 = vxpose.xlu0.b32.cont [14/16] 0.0, 128
        %237 = vxpose.xlu0.b32.cont [15/16] 0.0, 128
        %238 = vxpose.xlu0.b32.end [16/16] 0.0, 128
        %v239 = vpop.trf.xlu0
        %v240 = vpop.trf.xlu0
        %v241 = vpop.trf.xlu0
        %v242 = vpop.trf.xlu0
        %v243 = vpop.trf.xlu0
        %v244 = vpop.trf.xlu0
        %v245 = vpop.trf.xlu0
        %v246 = vpop.trf.xlu0
        %v247 = vpop.trf.xlu0
        %v248 = vpop.trf.xlu0
        %v249 = vpop.trf.xlu0
        %v250 = vpop.trf.xlu0
        %v251 = vpop.trf.xlu0
        %v252 = vpop.trf.xlu0
        %v253 = vpop.trf.xlu0
        %v254 = vpop.trf.xlu0
        %vm255 = vcmask 130048
        %v257 = vsel %vm255, %v239, 0
        %v260 = vsel %vm255, %v240, 0
        %v263 = vsel %vm255, %v219, 0
        %v266 = vsel %vm255, %v220, 0
        %268 = vmatprep.subr.mxu0 0.0
        %269 = vmatpush1.xpose.msra.mxu0 0.0
        %270 = vmatprep.subr.mxu0 0.0
        %271 = vmatpush1.xpose.msra.mxu0 0.0
        %272 = vmatprep.subr.mxu0 0.0
        %273 = vmatpush1.xpose.msra.mxu0 0.0
        %274 = vmatprep.subr.mxu0 0.0
        %275 = vmatpush1.xpose.msra.mxu0 0.0
        %276 = vmatprep.subr.mxu0 0.0
        %277 = vmatpush1.xpose.msra.mxu0 0.0
        %278 = vmatprep.subr.mxu0 0.0
        %279 = vmatpush1.xpose.msra.mxu0 0.0
        %280 = vmatprep.subr.mxu0 0.0
        %281 = vmatpush1.xpose.msra.mxu0 0.0
        %282 = vmatprep.subr.mxu0 0.0
        %283 = vmatpush1.xpose.msra.mxu0 0.0
        %284 = vmatprep.subr.mxu0 0.0
        %285 = vmatpush1.xpose.msra.mxu0 0.0
        %286 = vmatprep.subr.mxu0 0.0
        %287 = vmatpush1.xpose.msra.mxu0 0.0
        %288 = vmatprep.subr.mxu0 0.0
        %289 = vmatpush1.xpose.msra.mxu0 0.0
        %290 = vmatprep.subr.mxu0 0.0
        %291 = vmatpush1.xpose.msra.mxu0 0.0
        %292 = vmatprep.subr.mxu0 0.0
        %293 = vmatpush1.xpose.msra.mxu0 0.0
        %294 = vmatprep.subr.mxu0 0.0
        %295 = vmatpush1.xpose.msra.mxu0 0.0
        %296 = vmatprep.subr.mxu0 0.0
        %v297 = vand.u32 %v266, 4294901760
        %298 = vmatpush1.xpose.msra.mxu0 %v297
        %299 = vmatprep.subr.mxu0 0.0
        %v300 = vand.u32 %v263, 4294901760
        %301 = vmatpush1.xpose.msra.mxu0 %v300
        %302 = vmatprep.subr.mxu0 0.0
        %303 = vmatpush2.xpose.msra.mxu0 0.0
        %304 = vmatprep.subr.mxu0 0.0
        %305 = vmatpush2.xpose.msra.mxu0 0.0
        %306 = vmatprep.subr.mxu0 0.0
        %307 = vmatpush2.xpose.msra.mxu0 0.0
        %308 = vmatprep.subr.mxu0 0.0
        %309 = vmatpush2.xpose.msra.mxu0 0.0
        %310 = vmatprep.subr.mxu0 0.0
        %311 = vmatpush2.xpose.msra.mxu0 0.0
        %312 = vmatprep.subr.mxu0 0.0
        %313 = vmatpush2.xpose.msra.mxu0 0.0
        %314 = vmatprep.subr.mxu0 0.0
        %315 = vmatpush2.xpose.msra.mxu0 0.0
        %316 = vmatprep.subr.mxu0 0.0
        %317 = vmatpush2.xpose.msra.mxu0 0.0
        %318 = vmatprep.subr.mxu0 0.0
        %319 = vmatpush2.xpose.msra.mxu0 0.0
        %320 = vmatprep.subr.mxu0 0.0
        %321 = vmatpush2.xpose.msra.mxu0 0.0
        %322 = vmatprep.subr.mxu0 0.0
        %323 = vmatpush2.xpose.msra.mxu0 0.0
        %324 = vmatprep.subr.mxu0 0.0
        %325 = vmatpush2.xpose.msra.mxu0 0.0
        %326 = vmatprep.subr.mxu0 0.0
        %327 = vmatpush2.xpose.msra.mxu0 0.0
        %328 = vmatprep.subr.mxu0 0.0
        %329 = vmatpush2.xpose.msra.mxu0 0.0
        %330 = vmatprep.subr.mxu0 0.0
        %331 = vmatpush2.xpose.msra.mxu0 0.0
        %332 = vmatprep.subr.mxu0 0.0
        %333 = vmatpush2.xpose.msra.mxu0 0.0
        %334 = vmatprep.mubr.f32.mxu0 0.0
        %v335 = vand.u32 %v257, 4294901760
        %v336 = vsub.f32 %v257, %v335
        %v337 = vand.u32 %v336, 4294901760
        %v338 = vsub.f32 %v336, %v337
        %v339 = vand.u32 %v338, 4294901760
        %340 = vmatmul.mubr.f32.gmra.mxu0 %v339
        %v341 = vpop.f32.mrf.mxu0
        %v342 = vadd.f32 0.0, %v341
        %v343 = vpop.f32.mrf.mxu0
        %344 = vmatprep.mubr.f32.mxu0 0.0
        %v345 = vand.u32 %v260, 4294901760
        %v346 = vsub.f32 %v260, %v345
        %v347 = vand.u32 %v346, 4294901760
        %v348 = vsub.f32 %v346, %v347
        %v349 = vand.u32 %v348, 4294901760
        %350 = vmatmul.mubr.f32.gmra.mxu0 %v349
        %v351 = vpop.f32.mrf.mxu0
        %v352 = vadd.f32 0.0, %v351
        %v353 = vpop.f32.mrf.mxu0
        %354 = vdwg.mxu0
        %355 = vmatprep.subr.mxu0 0.0
        %356 = vmatpush1.xpose.msra.mxu0 0.0
        %357 = vmatprep.subr.mxu0 0.0
        %358 = vmatpush1.xpose.msra.mxu0 0.0
        %359 = vmatprep.subr.mxu0 0.0
        %360 = vmatpush1.xpose.msra.mxu0 0.0
        %361 = vmatprep.subr.mxu0 0.0
        %362 = vmatpush1.xpose.msra.mxu0 0.0
        %363 = vmatprep.subr.mxu0 0.0
        %364 = vmatpush1.xpose.msra.mxu0 0.0
        %365 = vmatprep.subr.mxu0 0.0
        %366 = vmatpush1.xpose.msra.mxu0 0.0
        %367 = vmatprep.subr.mxu0 0.0
        %368 = vmatpush1.xpose.msra.mxu0 0.0
        %369 = vmatprep.subr.mxu0 0.0
        %370 = vmatpush1.xpose.msra.mxu0 0.0
        %371 = vmatprep.subr.mxu0 0.0
        %372 = vmatpush1.xpose.msra.mxu0 0.0
        %373 = vmatprep.subr.mxu0 0.0
        %374 = vmatpush1.xpose.msra.mxu0 0.0
        %375 = vmatprep.subr.mxu0 0.0
        %376 = vmatpush1.xpose.msra.mxu0 0.0
        %377 = vmatprep.subr.mxu0 0.0
        %378 = vmatpush1.xpose.msra.mxu0 0.0
        %379 = vmatprep.subr.mxu0 0.0
        %380 = vmatpush1.xpose.msra.mxu0 0.0
        %381 = vmatprep.subr.mxu0 0.0
        %382 = vmatpush1.xpose.msra.mxu0 0.0
        %383 = vmatprep.subr.mxu0 0.0
        %v384 = vand.u32 %v266, 4294901760
        %v385 = vsub.f32 %v266, %v384
        %v386 = vand.u32 %v385, 4294901760
        %v387 = vsub.f32 %v385, %v386
        %v388 = vand.u32 %v387, 4294901760
        %389 = vmatpush1.xpose.msra.mxu0 %v388
        %390 = vmatprep.subr.mxu0 0.0
        %v391 = vand.u32 %v263, 4294901760
        %v392 = vsub.f32 %v263, %v391
        %v393 = vand.u32 %v392, 4294901760
        %v394 = vsub.f32 %v392, %v393
        %v395 = vand.u32 %v394, 4294901760
        %396 = vmatpush1.xpose.msra.mxu0 %v395
        %397 = vmatprep.subr.mxu0 0.0
        %398 = vmatpush2.xpose.msra.mxu0 0.0
        %399 = vmatprep.subr.mxu0 0.0
        %400 = vmatpush2.xpose.msra.mxu0 0.0
        %401 = vmatprep.subr.mxu0 0.0
        %402 = vmatpush2.xpose.msra.mxu0 0.0
        %403 = vmatprep.subr.mxu0 0.0
        %404 = vmatpush2.xpose.msra.mxu0 0.0
        %405 = vmatprep.subr.mxu0 0.0
        %406 = vmatpush2.xpose.msra.mxu0 0.0
        %407 = vmatprep.subr.mxu0 0.0
        %408 = vmatpush2.xpose.msra.mxu0 0.0
        %409 = vmatprep.subr.mxu0 0.0
        %410 = vmatpush2.xpose.msra.mxu0 0.0
        %411 = vmatprep.subr.mxu0 0.0
        %412 = vmatpush2.xpose.msra.mxu0 0.0
        %413 = vmatprep.subr.mxu0 0.0
        %414 = vmatpush2.xpose.msra.mxu0 0.0
        %415 = vmatprep.subr.mxu0 0.0
        %416 = vmatpush2.xpose.msra.mxu0 0.0
        %417 = vmatprep.subr.mxu0 0.0
        %418 = vmatpush2.xpose.msra.mxu0 0.0
        %419 = vmatprep.subr.mxu0 0.0
        %420 = vmatpush2.xpose.msra.mxu0 0.0
        %421 = vmatprep.subr.mxu0 0.0
        %422 = vmatpush2.xpose.msra.mxu0 0.0
        %423 = vmatprep.subr.mxu0 0.0
        %424 = vmatpush2.xpose.msra.mxu0 0.0
        %425 = vmatprep.subr.mxu0 0.0
        %426 = vmatpush2.xpose.msra.mxu0 0.0
        %427 = vmatprep.subr.mxu0 0.0
        %428 = vmatpush2.xpose.msra.mxu0 0.0
        %429 = vmatprep.mubr.f32.mxu0 0.0
        %v430 = vand.u32 %v257, 4294901760
        %431 = vmatmul.mubr.f32.gmra.mxu0 %v430
        %v432 = vpop.f32.mrf.mxu0
        %v433 = vadd.f32 %v342, %v432
        %v434 = vpop.f32.mrf.mxu0
        %435 = vmatprep.mubr.f32.mxu0 0.0
        %v436 = vand.u32 %v260, 4294901760
        %437 = vmatmul.mubr.f32.gmra.mxu0 %v436
        %v438 = vpop.f32.mrf.mxu0
        %v439 = vadd.f32 %v352, %v438
        %v440 = vpop.f32.mrf.mxu0
        %441 = vdwg.mxu0
        %442 = vmatprep.subr.mxu0 0.0
        %443 = vmatpush1.xpose.msra.mxu0 0.0
        %444 = vmatprep.subr.mxu0 0.0
        %445 = vmatpush1.xpose.msra.mxu0 0.0
        %446 = vmatprep.subr.mxu0 0.0
        %447 = vmatpush1.xpose.msra.mxu0 0.0
        %448 = vmatprep.subr.mxu0 0.0
        %449 = vmatpush1.xpose.msra.mxu0 0.0
        %450 = vmatprep.subr.mxu0 0.0
        %451 = vmatpush1.xpose.msra.mxu0 0.0
        %452 = vmatprep.subr.mxu0 0.0
        %453 = vmatpush1.xpose.msra.mxu0 0.0
        %454 = vmatprep.subr.mxu0 0.0
        %455 = vmatpush1.xpose.msra.mxu0 0.0
        %456 = vmatprep.subr.mxu0 0.0
        %457 = vmatpush1.xpose.msra.mxu0 0.0
        %458 = vmatprep.subr.mxu0 0.0
        %459 = vmatpush1.xpose.msra.mxu0 0.0
        %460 = vmatprep.subr.mxu0 0.0
        %461 = vmatpush1.xpose.msra.mxu0 0.0
        %462 = vmatprep.subr.mxu0 0.0
        %463 = vmatpush1.xpose.msra.mxu0 0.0
        %464 = vmatprep.subr.mxu0 0.0
        %465 = vmatpush1.xpose.msra.mxu0 0.0
        %466 = vmatprep.subr.mxu0 0.0
        %467 = vmatpush1.xpose.msra.mxu0 0.0
        %468 = vmatprep.subr.mxu0 0.0
        %469 = vmatpush1.xpose.msra.mxu0 0.0
        %470 = vmatprep.subr.mxu0 0.0
        %v471 = vand.u32 %v266, 4294901760
        %v472 = vsub.f32 %v266, %v471
        %473 = vmatpush1.xpose.msra.mxu0 %v472
        %474 = vmatprep.subr.mxu0 0.0
        %v475 = vand.u32 %v263, 4294901760
        %v476 = vsub.f32 %v263, %v475
        %477 = vmatpush1.xpose.msra.mxu0 %v476
        %478 = vmatprep.subr.mxu0 0.0
        %479 = vmatpush2.xpose.msra.mxu0 0.0
        %480 = vmatprep.subr.mxu0 0.0
        %481 = vmatpush2.xpose.msra.mxu0 0.0
        %482 = vmatprep.subr.mxu0 0.0
        %483 = vmatpush2.xpose.msra.mxu0 0.0
        %484 = vmatprep.subr.mxu0 0.0
        %485 = vmatpush2.xpose.msra.mxu0 0.0
        %486 = vmatprep.subr.mxu0 0.0
        %487 = vmatpush2.xpose.msra.mxu0 0.0
        %488 = vmatprep.subr.mxu0 0.0
        %489 = vmatpush2.xpose.msra.mxu0 0.0
        %490 = vmatprep.subr.mxu0 0.0
        %491 = vmatpush2.xpose.msra.mxu0 0.0
        %492 = vmatprep.subr.mxu0 0.0
        %493 = vmatpush2.xpose.msra.mxu0 0.0
        %494 = vmatprep.subr.mxu0 0.0
        %495 = vmatpush2.xpose.msra.mxu0 0.0
        %496 = vmatprep.subr.mxu0 0.0
        %497 = vmatpush2.xpose.msra.mxu0 0.0
        %498 = vmatprep.subr.mxu0 0.0
        %499 = vmatpush2.xpose.msra.mxu0 0.0
        %500 = vmatprep.subr.mxu0 0.0
        %501 = vmatpush2.xpose.msra.mxu0 0.0
        %502 = vmatprep.subr.mxu0 0.0
        %503 = vmatpush2.xpose.msra.mxu0 0.0
        %504 = vmatprep.subr.mxu0 0.0
        %505 = vmatpush2.xpose.msra.mxu0 0.0
        %506 = vmatprep.subr.mxu0 0.0
        %507 = vmatpush2.xpose.msra.mxu0 0.0
        %508 = vmatprep.subr.mxu0 0.0
        %509 = vmatpush2.xpose.msra.mxu0 0.0
        %510 = vmatprep.mubr.f32.mxu0 0.0
        %v511 = vand.u32 %v257, 4294901760
        %v512 = vsub.f32 %v257, %v511
        %513 = vmatmul.mubr.f32.gmra.mxu0 %v512
        %v514 = vpop.f32.mrf.mxu0
        %v515 = vadd.f32 %v433, %v514
        %v516 = vpop.f32.mrf.mxu0
        %517 = vmatprep.mubr.f32.mxu0 0.0
        %v518 = vand.u32 %v260, 4294901760
        %v519 = vsub.f32 %v260, %v518
        %520 = vmatmul.mubr.f32.gmra.mxu0 %v519
        %v521 = vpop.f32.mrf.mxu0
        %v522 = vadd.f32 %v439, %v521
        %v523 = vpop.f32.mrf.mxu0
        %524 = vdwg.mxu0
        %525 = vmatprep.subr.mxu0 0.0
        %526 = vmatpush1.xpose.msra.mxu0 0.0
        %527 = vmatprep.subr.mxu0 0.0
        %528 = vmatpush1.xpose.msra.mxu0 0.0
        %529 = vmatprep.subr.mxu0 0.0
        %530 = vmatpush1.xpose.msra.mxu0 0.0
        %531 = vmatprep.subr.mxu0 0.0
        %532 = vmatpush1.xpose.msra.mxu0 0.0
        %533 = vmatprep.subr.mxu0 0.0
        %534 = vmatpush1.xpose.msra.mxu0 0.0
        %535 = vmatprep.subr.mxu0 0.0
        %536 = vmatpush1.xpose.msra.mxu0 0.0
        %537 = vmatprep.subr.mxu0 0.0
        %538 = vmatpush1.xpose.msra.mxu0 0.0
        %539 = vmatprep.subr.mxu0 0.0
        %540 = vmatpush1.xpose.msra.mxu0 0.0
        %541 = vmatprep.subr.mxu0 0.0
        %542 = vmatpush1.xpose.msra.mxu0 0.0
        %543 = vmatprep.subr.mxu0 0.0
        %544 = vmatpush1.xpose.msra.mxu0 0.0
        %545 = vmatprep.subr.mxu0 0.0
        %546 = vmatpush1.xpose.msra.mxu0 0.0
        %547 = vmatprep.subr.mxu0 0.0
        %548 = vmatpush1.xpose.msra.mxu0 0.0
        %549 = vmatprep.subr.mxu0 0.0
        %550 = vmatpush1.xpose.msra.mxu0 0.0
        %551 = vmatprep.subr.mxu0 0.0
        %552 = vmatpush1.xpose.msra.mxu0 0.0
        %553 = vmatprep.subr.mxu0 0.0
        %v554 = vand.u32 %v266, 4294901760
        %555 = vmatpush1.xpose.msra.mxu0 %v554
        %556 = vmatprep.subr.mxu0 0.0
        %v557 = vand.u32 %v263, 4294901760
        %558 = vmatpush1.xpose.msra.mxu0 %v557
        %559 = vmatprep.subr.mxu0 0.0
        %560 = vmatpush2.xpose.msra.mxu0 0.0
        %561 = vmatprep.subr.mxu0 0.0
        %562 = vmatpush2.xpose.msra.mxu0 0.0
        %563 = vmatprep.subr.mxu0 0.0
        %564 = vmatpush2.xpose.msra.mxu0 0.0
        %565 = vmatprep.subr.mxu0 0.0
        %566 = vmatpush2.xpose.msra.mxu0 0.0
        %567 = vmatprep.subr.mxu0 0.0
        %568 = vmatpush2.xpose.msra.mxu0 0.0
        %569 = vmatprep.subr.mxu0 0.0
        %570 = vmatpush2.xpose.msra.mxu0 0.0
        %571 = vmatprep.subr.mxu0 0.0
        %572 = vmatpush2.xpose.msra.mxu0 0.0
        %573 = vmatprep.subr.mxu0 0.0
        %574 = vmatpush2.xpose.msra.mxu0 0.0
        %575 = vmatprep.subr.mxu0 0.0
        %576 = vmatpush2.xpose.msra.mxu0 0.0
        %577 = vmatprep.subr.mxu0 0.0
        %578 = vmatpush2.xpose.msra.mxu0 0.0
        %579 = vmatprep.subr.mxu0 0.0
        %580 = vmatpush2.xpose.msra.mxu0 0.0
        %581 = vmatprep.subr.mxu0 0.0
        %582 = vmatpush2.xpose.msra.mxu0 0.0
        %583 = vmatprep.subr.mxu0 0.0
        %584 = vmatpush2.xpose.msra.mxu0 0.0
        %585 = vmatprep.subr.mxu0 0.0
        %586 = vmatpush2.xpose.msra.mxu0 0.0
        %587 = vmatprep.subr.mxu0 0.0
        %588 = vmatpush2.xpose.msra.mxu0 0.0
        %589 = vmatprep.subr.mxu0 0.0
        %590 = vmatpush2.xpose.msra.mxu0 0.0
        %591 = vmatprep.mubr.f32.mxu0 0.0
        %v592 = vand.u32 %v257, 4294901760
        %v593 = vsub.f32 %v257, %v592
        %v594 = vand.u32 %v593, 4294901760
        %595 = vmatmul.mubr.f32.gmra.mxu0 %v594
        %v596 = vpop.f32.mrf.mxu0
        %v597 = vadd.f32 %v515, %v596
        %v598 = vpop.f32.mrf.mxu0
        %599 = vmatprep.mubr.f32.mxu0 0.0
        %v600 = vand.u32 %v260, 4294901760
        %v601 = vsub.f32 %v260, %v600
        %v602 = vand.u32 %v601, 4294901760
        %603 = vmatmul.mubr.f32.gmra.mxu0 %v602
        %v604 = vpop.f32.mrf.mxu0
        %v605 = vadd.f32 %v522, %v604
        %v606 = vpop.f32.mrf.mxu0
        %607 = vdwg.mxu0
        %608 = vmatprep.subr.mxu0 0.0
        %609 = vmatpush1.xpose.msra.mxu0 0.0
        %610 = vmatprep.subr.mxu0 0.0
        %611 = vmatpush1.xpose.msra.mxu0 0.0
        %612 = vmatprep.subr.mxu0 0.0
        %613 = vmatpush1.xpose.msra.mxu0 0.0
        %614 = vmatprep.subr.mxu0 0.0
        %615 = vmatpush1.xpose.msra.mxu0 0.0
        %616 = vmatprep.subr.mxu0 0.0
        %617 = vmatpush1.xpose.msra.mxu0 0.0
        %618 = vmatprep.subr.mxu0 0.0
        %619 = vmatpush1.xpose.msra.mxu0 0.0
        %620 = vmatprep.subr.mxu0 0.0
        %621 = vmatpush1.xpose.msra.mxu0 0.0
        %622 = vmatprep.subr.mxu0 0.0
        %623 = vmatpush1.xpose.msra.mxu0 0.0
        %624 = vmatprep.subr.mxu0 0.0
        %625 = vmatpush1.xpose.msra.mxu0 0.0
        %626 = vmatprep.subr.mxu0 0.0
        %627 = vmatpush1.xpose.msra.mxu0 0.0
        %628 = vmatprep.subr.mxu0 0.0
        %629 = vmatpush1.xpose.msra.mxu0 0.0
        %630 = vmatprep.subr.mxu0 0.0
        %631 = vmatpush1.xpose.msra.mxu0 0.0
        %632 = vmatprep.subr.mxu0 0.0
        %633 = vmatpush1.xpose.msra.mxu0 0.0
        %634 = vmatprep.subr.mxu0 0.0
        %635 = vmatpush1.xpose.msra.mxu0 0.0
        %636 = vmatprep.subr.mxu0 0.0
        %v637 = vand.u32 %v266, 4294901760
        %v638 = vsub.f32 %v266, %v637
        %v639 = vand.u32 %v638, 4294901760
        %640 = vmatpush1.xpose.msra.mxu0 %v639
        %641 = vmatprep.subr.mxu0 0.0
        %v642 = vand.u32 %v263, 4294901760
        %v643 = vsub.f32 %v263, %v642
        %v644 = vand.u32 %v643, 4294901760
        %645 = vmatpush1.xpose.msra.mxu0 %v644
        %646 = vmatprep.subr.mxu0 0.0
        %647 = vmatpush2.xpose.msra.mxu0 0.0
        %648 = vmatprep.subr.mxu0 0.0
        %649 = vmatpush2.xpose.msra.mxu0 0.0
        %650 = vmatprep.subr.mxu0 0.0
        %651 = vmatpush2.xpose.msra.mxu0 0.0
        %652 = vmatprep.subr.mxu0 0.0
        %653 = vmatpush2.xpose.msra.mxu0 0.0
        %654 = vmatprep.subr.mxu0 0.0
        %655 = vmatpush2.xpose.msra.mxu0 0.0
        %656 = vmatprep.subr.mxu0 0.0
        %657 = vmatpush2.xpose.msra.mxu0 0.0
        %658 = vmatprep.subr.mxu0 0.0
        %659 = vmatpush2.xpose.msra.mxu0 0.0
        %660 = vmatprep.subr.mxu0 0.0
        %661 = vmatpush2.xpose.msra.mxu0 0.0
        %662 = vmatprep.subr.mxu0 0.0
        %663 = vmatpush2.xpose.msra.mxu0 0.0
        %664 = vmatprep.subr.mxu0 0.0
        %665 = vmatpush2.xpose.msra.mxu0 0.0
        %666 = vmatprep.subr.mxu0 0.0
        %667 = vmatpush2.xpose.msra.mxu0 0.0
        %668 = vmatprep.subr.mxu0 0.0
        %669 = vmatpush2.xpose.msra.mxu0 0.0
        %670 = vmatprep.subr.mxu0 0.0
        %671 = vmatpush2.xpose.msra.mxu0 0.0
        %672 = vmatprep.subr.mxu0 0.0
        %673 = vmatpush2.xpose.msra.mxu0 0.0
        %674 = vmatprep.subr.mxu0 0.0
        %675 = vmatpush2.xpose.msra.mxu0 0.0
        %676 = vmatprep.subr.mxu0 0.0
        %677 = vmatpush2.xpose.msra.mxu0 0.0
        %678 = vmatprep.mubr.f32.mxu0 0.0
        %v679 = vand.u32 %v257, 4294901760
        %680 = vmatmul.mubr.f32.gmra.mxu0 %v679
        %v681 = vpop.f32.mrf.mxu0
        %v682 = vadd.f32 %v597, %v681
        %v683 = vpop.f32.mrf.mxu0
        %684 = vmatprep.mubr.f32.mxu0 0.0
        %v685 = vand.u32 %v260, 4294901760
        %686 = vmatmul.mubr.f32.gmra.mxu0 %v685
        %v687 = vpop.f32.mrf.mxu0
        %v688 = vadd.f32 %v605, %v687
        %v689 = vpop.f32.mrf.mxu0
        %690 = vdwg.mxu0
        %691 = vmatprep.subr.mxu0 0.0
        %692 = vmatpush1.xpose.msra.mxu0 0.0
        %693 = vmatprep.subr.mxu0 0.0
        %694 = vmatpush1.xpose.msra.mxu0 0.0
        %695 = vmatprep.subr.mxu0 0.0
        %696 = vmatpush1.xpose.msra.mxu0 0.0
        %697 = vmatprep.subr.mxu0 0.0
        %698 = vmatpush1.xpose.msra.mxu0 0.0
        %699 = vmatprep.subr.mxu0 0.0
        %700 = vmatpush1.xpose.msra.mxu0 0.0
        %701 = vmatprep.subr.mxu0 0.0
        %702 = vmatpush1.xpose.msra.mxu0 0.0
        %703 = vmatprep.subr.mxu0 0.0
        %704 = vmatpush1.xpose.msra.mxu0 0.0
        %705 = vmatprep.subr.mxu0 0.0
        %706 = vmatpush1.xpose.msra.mxu0 0.0
        %707 = vmatprep.subr.mxu0 0.0
        %708 = vmatpush1.xpose.msra.mxu0 0.0
        %709 = vmatprep.subr.mxu0 0.0
        %710 = vmatpush1.xpose.msra.mxu0 0.0
        %711 = vmatprep.subr.mxu0 0.0
        %712 = vmatpush1.xpose.msra.mxu0 0.0
        %713 = vmatprep.subr.mxu0 0.0
        %714 = vmatpush1.xpose.msra.mxu0 0.0
        %715 = vmatprep.subr.mxu0 0.0
        %716 = vmatpush1.xpose.msra.mxu0 0.0
        %717 = vmatprep.subr.mxu0 0.0
        %718 = vmatpush1.xpose.msra.mxu0 0.0
        %719 = vmatprep.subr.mxu0 0.0
        %v720 = vand.u32 %v266, 4294901760
        %721 = vmatpush1.xpose.msra.mxu0 %v720
        %722 = vmatprep.subr.mxu0 0.0
        %v723 = vand.u32 %v263, 4294901760
        %724 = vmatpush1.xpose.msra.mxu0 %v723
        %725 = vmatprep.subr.mxu0 0.0
        %726 = vmatpush2.xpose.msra.mxu0 0.0
        %727 = vmatprep.subr.mxu0 0.0
        %728 = vmatpush2.xpose.msra.mxu0 0.0
        %729 = vmatprep.subr.mxu0 0.0
        %730 = vmatpush2.xpose.msra.mxu0 0.0
        %731 = vmatprep.subr.mxu0 0.0
        %732 = vmatpush2.xpose.msra.mxu0 0.0
        %733 = vmatprep.subr.mxu0 0.0
        %734 = vmatpush2.xpose.msra.mxu0 0.0
        %735 = vmatprep.subr.mxu0 0.0
        %736 = vmatpush2.xpose.msra.mxu0 0.0
        %737 = vmatprep.subr.mxu0 0.0
        %738 = vmatpush2.xpose.msra.mxu0 0.0
        %739 = vmatprep.subr.mxu0 0.0
        %740 = vmatpush2.xpose.msra.mxu0 0.0
        %741 = vmatprep.subr.mxu0 0.0
        %742 = vmatpush2.xpose.msra.mxu0 0.0
        %743 = vmatprep.subr.mxu0 0.0
        %744 = vmatpush2.xpose.msra.mxu0 0.0
        %745 = vmatprep.subr.mxu0 0.0
        %746 = vmatpush2.xpose.msra.mxu0 0.0
        %747 = vmatprep.subr.mxu0 0.0
        %748 = vmatpush2.xpose.msra.mxu0 0.0
        %749 = vmatprep.subr.mxu0 0.0
        %750 = vmatpush2.xpose.msra.mxu0 0.0
        %751 = vmatprep.subr.mxu0 0.0
        %752 = vmatpush2.xpose.msra.mxu0 0.0
        %753 = vmatprep.subr.mxu0 0.0
        %754 = vmatpush2.xpose.msra.mxu0 0.0
        %755 = vmatprep.subr.mxu0 0.0
        %756 = vmatpush2.xpose.msra.mxu0 0.0
        %757 = vmatprep.mubr.f32.mxu0 0.0
        %v758 = vand.u32 %v257, 4294901760
        %759 = vmatmul.mubr.f32.gmra.mxu0 %v758
        %v760 = vpop.f32.mrf.mxu0
        %v761 = vadd.f32 %v682, %v760
        %v762 = vpop.f32.mrf.mxu0
        %763 = vmatprep.mubr.f32.mxu0 0.0
        %v764 = vand.u32 %v260, 4294901760
        %765 = vmatmul.mubr.f32.gmra.mxu0 %v764
        %v766 = vpop.f32.mrf.mxu0
        %v767 = vadd.f32 %v688, %v766
        %v768 = vpop.f32.mrf.mxu0
        %769 = vdwg.mxu0
        %770 = vst.msk [vmem:[%s215] sm:$0xff] %vm255, %v761
        %771 = vst.msk [vmem:[%s215 + $0x8] sm:$0xff] %vm255, %v767
        %v772 = vsub.f32 %v221, %v761
        %v773 = vsub.f32 %v222, %v767
        %774 = vst.msk [vmem:[%s208] sm:$0xff] %vm255, %v772
        %775 = vst.msk [vmem:[%s208 + $0x8] sm:$0xff] %vm255, %v773
        %s776 = scalar_lea.vmem %s188, 16 [#allocation5]
        %v777 = vld [vmem:[%s776] sm:$0xff]
        %v778 = vld [vmem:[%s776 + $0x8] sm:$0xff]
        %779 = vxpose.xlu0.b32.start [1/16] %v777, 128
        %780 = vxpose.xlu0.b32.cont [2/16] %v778, 128
        %781 = vxpose.xlu0.b32.cont [3/16] 0.0, 128
        %782 = vxpose.xlu0.b32.cont [4/16] 0.0, 128
        %783 = vxpose.xlu0.b32.cont [5/16] 0.0, 128
        %784 = vxpose.xlu0.b32.cont [6/16] 0.0, 128
        %785 = vxpose.xlu0.b32.cont [7/16] 0.0, 128
        %786 = vxpose.xlu0.b32.cont [8/16] 0.0, 128
        %787 = vxpose.xlu0.b32.cont [9/16] 0.0, 128
        %788 = vxpose.xlu0.b32.cont [10/16] 0.0, 128
        %789 = vxpose.xlu0.b32.cont [11/16] 0.0, 128
        %790 = vxpose.xlu0.b32.cont [12/16] 0.0, 128
        %791 = vxpose.xlu0.b32.cont [13/16] 0.0, 128
        %792 = vxpose.xlu0.b32.cont [14/16] 0.0, 128
        %793 = vxpose.xlu0.b32.cont [15/16] 0.0, 128
        %794 = vxpose.xlu0.b32.end [16/16] 0.0, 128
        %v795 = vpop.trf.xlu0
        %v796 = vpop.trf.xlu0
        %v797 = vpop.trf.xlu0
        %v798 = vpop.trf.xlu0
        %v799 = vpop.trf.xlu0
        %v800 = vpop.trf.xlu0
        %v801 = vpop.trf.xlu0
        %v802 = vpop.trf.xlu0
        %v803 = vpop.trf.xlu0
        %v804 = vpop.trf.xlu0
        %v805 = vpop.trf.xlu0
        %v806 = vpop.trf.xlu0
        %v807 = vpop.trf.xlu0
        %v808 = vpop.trf.xlu0
        %v809 = vpop.trf.xlu0
        %v810 = vpop.trf.xlu0
        %v812 = vsel %vm255, %v795, 0
        %v815 = vsel %vm255, %v796, 0
        %817 = vmatprep.subr.mxu0 0.0
        %818 = vmatpush1.xpose.msra.mxu0 0.0
        %819 = vmatprep.subr.mxu0 0.0
        %820 = vmatpush1.xpose.msra.mxu0 0.0
        %821 = vmatprep.subr.mxu0 0.0
        %822 = vmatpush1.xpose.msra.mxu0 0.0
        %823 = vmatprep.subr.mxu0 0.0
        %824 = vmatpush1.xpose.msra.mxu0 0.0
        %825 = vmatprep.subr.mxu0 0.0
        %826 = vmatpush1.xpose.msra.mxu0 0.0
        %827 = vmatprep.subr.mxu0 0.0
        %828 = vmatpush1.xpose.msra.mxu0 0.0
        %829 = vmatprep.subr.mxu0 0.0
        %830 = vmatpush1.xpose.msra.mxu0 0.0
        %831 = vmatprep.subr.mxu0 0.0
        %832 = vmatpush1.xpose.msra.mxu0 0.0
        %833 = vmatprep.subr.mxu0 0.0
        %834 = vmatpush1.xpose.msra.mxu0 0.0
        %835 = vmatprep.subr.mxu0 0.0
        %836 = vmatpush1.xpose.msra.mxu0 0.0
        %837 = vmatprep.subr.mxu0 0.0
        %838 = vmatpush1.xpose.msra.mxu0 0.0
        %839 = vmatprep.subr.mxu0 0.0
        %840 = vmatpush1.xpose.msra.mxu0 0.0
        %841 = vmatprep.subr.mxu0 0.0
        %842 = vmatpush1.xpose.msra.mxu0 0.0
        %843 = vmatprep.subr.mxu0 0.0
        %844 = vmatpush1.xpose.msra.mxu0 0.0
        %845 = vmatprep.subr.mxu0 0.0
        %v846 = vand.u32 %v266, 4294901760
        %847 = vmatpush1.xpose.msra.mxu0 %v846
        %848 = vmatprep.subr.mxu0 0.0
        %v849 = vand.u32 %v263, 4294901760
        %850 = vmatpush1.xpose.msra.mxu0 %v849
        %851 = vmatprep.subr.mxu0 0.0
        %852 = vmatpush2.xpose.msra.mxu0 0.0
        %853 = vmatprep.subr.mxu0 0.0
        %854 = vmatpush2.xpose.msra.mxu0 0.0
        %855 = vmatprep.subr.mxu0 0.0
        %856 = vmatpush2.xpose.msra.mxu0 0.0
        %857 = vmatprep.subr.mxu0 0.0
        %858 = vmatpush2.xpose.msra.mxu0 0.0
        %859 = vmatprep.subr.mxu0 0.0
        %860 = vmatpush2.xpose.msra.mxu0 0.0
        %861 = vmatprep.subr.mxu0 0.0
        %862 = vmatpush2.xpose.msra.mxu0 0.0
        %863 = vmatprep.subr.mxu0 0.0
        %864 = vmatpush2.xpose.msra.mxu0 0.0
        %865 = vmatprep.subr.mxu0 0.0
        %866 = vmatpush2.xpose.msra.mxu0 0.0
        %867 = vmatprep.subr.mxu0 0.0
        %868 = vmatpush2.xpose.msra.mxu0 0.0
        %869 = vmatprep.subr.mxu0 0.0
        %870 = vmatpush2.xpose.msra.mxu0 0.0
        %871 = vmatprep.subr.mxu0 0.0
        %872 = vmatpush2.xpose.msra.mxu0 0.0
        %873 = vmatprep.subr.mxu0 0.0
        %874 = vmatpush2.xpose.msra.mxu0 0.0
        %875 = vmatprep.subr.mxu0 0.0
        %876 = vmatpush2.xpose.msra.mxu0 0.0
        %877 = vmatprep.subr.mxu0 0.0
        %878 = vmatpush2.xpose.msra.mxu0 0.0
        %879 = vmatprep.subr.mxu0 0.0
        %880 = vmatpush2.xpose.msra.mxu0 0.0
        %881 = vmatprep.subr.mxu0 0.0
        %882 = vmatpush2.xpose.msra.mxu0 0.0
        %883 = vmatprep.mubr.f32.mxu0 0.0
        %v884 = vand.u32 %v812, 4294901760
        %v885 = vsub.f32 %v812, %v884
        %v886 = vand.u32 %v885, 4294901760
        %v887 = vsub.f32 %v885, %v886
        %v888 = vand.u32 %v887, 4294901760
        %889 = vmatmul.mubr.f32.gmra.mxu0 %v888
        %v890 = vpop.f32.mrf.mxu0
        %v891 = vadd.f32 0.0, %v890
        %v892 = vpop.f32.mrf.mxu0
        %893 = vmatprep.mubr.f32.mxu0 0.0
        %v894 = vand.u32 %v815, 4294901760
        %v895 = vsub.f32 %v815, %v894
        %v896 = vand.u32 %v895, 4294901760
        %v897 = vsub.f32 %v895, %v896
        %v898 = vand.u32 %v897, 4294901760
        %899 = vmatmul.mubr.f32.gmra.mxu0 %v898
        %v900 = vpop.f32.mrf.mxu0
        %v901 = vadd.f32 0.0, %v900
        %v902 = vpop.f32.mrf.mxu0
        %903 = vdwg.mxu0
        %904 = vmatprep.subr.mxu0 0.0
        %905 = vmatpush1.xpose.msra.mxu0 0.0
        %906 = vmatprep.subr.mxu0 0.0
        %907 = vmatpush1.xpose.msra.mxu0 0.0
        %908 = vmatprep.subr.mxu0 0.0
        %909 = vmatpush1.xpose.msra.mxu0 0.0
        %910 = vmatprep.subr.mxu0 0.0
        %911 = vmatpush1.xpose.msra.mxu0 0.0
        %912 = vmatprep.subr.mxu0 0.0
        %913 = vmatpush1.xpose.msra.mxu0 0.0
        %914 = vmatprep.subr.mxu0 0.0
        %915 = vmatpush1.xpose.msra.mxu0 0.0
        %916 = vmatprep.subr.mxu0 0.0
        %917 = vmatpush1.xpose.msra.mxu0 0.0
        %918 = vmatprep.subr.mxu0 0.0
        %919 = vmatpush1.xpose.msra.mxu0 0.0
        %920 = vmatprep.subr.mxu0 0.0
        %921 = vmatpush1.xpose.msra.mxu0 0.0
        %922 = vmatprep.subr.mxu0 0.0
        %923 = vmatpush1.xpose.msra.mxu0 0.0
        %924 = vmatprep.subr.mxu0 0.0
        %925 = vmatpush1.xpose.msra.mxu0 0.0
        %926 = vmatprep.subr.mxu0 0.0
        %927 = vmatpush1.xpose.msra.mxu0 0.0
        %928 = vmatprep.subr.mxu0 0.0
        %929 = vmatpush1.xpose.msra.mxu0 0.0
        %930 = vmatprep.subr.mxu0 0.0
        %931 = vmatpush1.xpose.msra.mxu0 0.0
        %932 = vmatprep.subr.mxu0 0.0
        %v933 = vand.u32 %v266, 4294901760
        %v934 = vsub.f32 %v266, %v933
        %v935 = vand.u32 %v934, 4294901760
        %v936 = vsub.f32 %v934, %v935
        %v937 = vand.u32 %v936, 4294901760
        %938 = vmatpush1.xpose.msra.mxu0 %v937
        %939 = vmatprep.subr.mxu0 0.0
        %v940 = vand.u32 %v263, 4294901760
        %v941 = vsub.f32 %v263, %v940
        %v942 = vand.u32 %v941, 4294901760
        %v943 = vsub.f32 %v941, %v942
        %v944 = vand.u32 %v943, 4294901760
        %945 = vmatpush1.xpose.msra.mxu0 %v944
        %946 = vmatprep.subr.mxu0 0.0
        %947 = vmatpush2.xpose.msra.mxu0 0.0
        %948 = vmatprep.subr.mxu0 0.0
        %949 = vmatpush2.xpose.msra.mxu0 0.0
        %950 = vmatprep.subr.mxu0 0.0
        %951 = vmatpush2.xpose.msra.mxu0 0.0
        %952 = vmatprep.subr.mxu0 0.0
        %953 = vmatpush2.xpose.msra.mxu0 0.0
        %954 = vmatprep.subr.mxu0 0.0
        %955 = vmatpush2.xpose.msra.mxu0 0.0
        %956 = vmatprep.subr.mxu0 0.0
        %957 = vmatpush2.xpose.msra.mxu0 0.0
        %958 = vmatprep.subr.mxu0 0.0
        %959 = vmatpush2.xpose.msra.mxu0 0.0
        %960 = vmatprep.subr.mxu0 0.0
        %961 = vmatpush2.xpose.msra.mxu0 0.0
        %962 = vmatprep.subr.mxu0 0.0
        %963 = vmatpush2.xpose.msra.mxu0 0.0
        %964 = vmatprep.subr.mxu0 0.0
        %965 = vmatpush2.xpose.msra.mxu0 0.0
        %966 = vmatprep.subr.mxu0 0.0
        %967 = vmatpush2.xpose.msra.mxu0 0.0
        %968 = vmatprep.subr.mxu0 0.0
        %969 = vmatpush2.xpose.msra.mxu0 0.0
        %970 = vmatprep.subr.mxu0 0.0
        %971 = vmatpush2.xpose.msra.mxu0 0.0
        %972 = vmatprep.subr.mxu0 0.0
        %973 = vmatpush2.xpose.msra.mxu0 0.0
        %974 = vmatprep.subr.mxu0 0.0
        %975 = vmatpush2.xpose.msra.mxu0 0.0
        %976 = vmatprep.subr.mxu0 0.0
        %977 = vmatpush2.xpose.msra.mxu0 0.0
        %978 = vmatprep.mubr.f32.mxu0 0.0
        %v979 = vand.u32 %v812, 4294901760
        %980 = vmatmul.mubr.f32.gmra.mxu0 %v979
        %v981 = vpop.f32.mrf.mxu0
        %v982 = vadd.f32 %v891, %v981
        %v983 = vpop.f32.mrf.mxu0
        %984 = vmatprep.mubr.f32.mxu0 0.0
        %v985 = vand.u32 %v815, 4294901760
        %986 = vmatmul.mubr.f32.gmra.mxu0 %v985
        %v987 = vpop.f32.mrf.mxu0
        %v988 = vadd.f32 %v901, %v987
        %v989 = vpop.f32.mrf.mxu0
        %990 = vdwg.mxu0
        %991 = vmatprep.subr.mxu0 0.0
        %992 = vmatpush1.xpose.msra.mxu0 0.0
        %993 = vmatprep.subr.mxu0 0.0
        %994 = vmatpush1.xpose.msra.mxu0 0.0
        %995 = vmatprep.subr.mxu0 0.0
        %996 = vmatpush1.xpose.msra.mxu0 0.0
        %997 = vmatprep.subr.mxu0 0.0
        %998 = vmatpush1.xpose.msra.mxu0 0.0
        %999 = vmatprep.subr.mxu0 0.0
        %1000 = vmatpush1.xpose.msra.mxu0 0.0
        %1001 = vmatprep.subr.mxu0 0.0
        %1002 = vmatpush1.xpose.msra.mxu0 0.0
        %1003 = vmatprep.subr.mxu0 0.0
        %1004 = vmatpush1.xpose.msra.mxu0 0.0
        %1005 = vmatprep.subr.mxu0 0.0
        %1006 = vmatpush1.xpose.msra.mxu0 0.0
        %1007 = vmatprep.subr.mxu0 0.0
        %1008 = vmatpush1.xpose.msra.mxu0 0.0
        %1009 = vmatprep.subr.mxu0 0.0
        %1010 = vmatpush1.xpose.msra.mxu0 0.0
        %1011 = vmatprep.subr.mxu0 0.0
        %1012 = vmatpush1.xpose.msra.mxu0 0.0
        %1013 = vmatprep.subr.mxu0 0.0
        %1014 = vmatpush1.xpose.msra.mxu0 0.0
        %1015 = vmatprep.subr.mxu0 0.0
        %1016 = vmatpush1.xpose.msra.mxu0 0.0
        %1017 = vmatprep.subr.mxu0 0.0
        %1018 = vmatpush1.xpose.msra.mxu0 0.0
        %1019 = vmatprep.subr.mxu0 0.0
        %v1020 = vand.u32 %v266, 4294901760
        %v1021 = vsub.f32 %v266, %v1020
        %1022 = vmatpush1.xpose.msra.mxu0 %v1021
        %1023 = vmatprep.subr.mxu0 0.0
        %v1024 = vand.u32 %v263, 4294901760
        %v1025 = vsub.f32 %v263, %v1024
        %1026 = vmatpush1.xpose.msra.mxu0 %v1025
        %1027 = vmatprep.subr.mxu0 0.0
        %1028 = vmatpush2.xpose.msra.mxu0 0.0
        %1029 = vmatprep.subr.mxu0 0.0
        %1030 = vmatpush2.xpose.msra.mxu0 0.0
        %1031 = vmatprep.subr.mxu0 0.0
        %1032 = vmatpush2.xpose.msra.mxu0 0.0
        %1033 = vmatprep.subr.mxu0 0.0
        %1034 = vmatpush2.xpose.msra.mxu0 0.0
        %1035 = vmatprep.subr.mxu0 0.0
        %1036 = vmatpush2.xpose.msra.mxu0 0.0
        %1037 = vmatprep.subr.mxu0 0.0
        %1038 = vmatpush2.xpose.msra.mxu0 0.0
        %1039 = vmatprep.subr.mxu0 0.0
        %1040 = vmatpush2.xpose.msra.mxu0 0.0
        %1041 = vmatprep.subr.mxu0 0.0
        %1042 = vmatpush2.xpose.msra.mxu0 0.0
        %1043 = vmatprep.subr.mxu0 0.0
        %1044 = vmatpush2.xpose.msra.mxu0 0.0
        %1045 = vmatprep.subr.mxu0 0.0
        %1046 = vmatpush2.xpose.msra.mxu0 0.0
        %1047 = vmatprep.subr.mxu0 0.0
        %1048 = vmatpush2.xpose.msra.mxu0 0.0
        %1049 = vmatprep.subr.mxu0 0.0
        %1050 = vmatpush2.xpose.msra.mxu0 0.0
        %1051 = vmatprep.subr.mxu0 0.0
        %1052 = vmatpush2.xpose.msra.mxu0 0.0
        %1053 = vmatprep.subr.mxu0 0.0
        %1054 = vmatpush2.xpose.msra.mxu0 0.0
        %1055 = vmatprep.subr.mxu0 0.0
        %1056 = vmatpush2.xpose.msra.mxu0 0.0
        %1057 = vmatprep.subr.mxu0 0.0
        %1058 = vmatpush2.xpose.msra.mxu0 0.0
        %1059 = vmatprep.mubr.f32.mxu0 0.0
        %v1060 = vand.u32 %v812, 4294901760
        %v1061 = vsub.f32 %v812, %v1060
        %1062 = vmatmul.mubr.f32.gmra.mxu0 %v1061
        %v1063 = vpop.f32.mrf.mxu0
        %v1064 = vadd.f32 %v982, %v1063
        %v1065 = vpop.f32.mrf.mxu0
        %1066 = vmatprep.mubr.f32.mxu0 0.0
        %v1067 = vand.u32 %v815, 4294901760
        %v1068 = vsub.f32 %v815, %v1067
        %1069 = vmatmul.mubr.f32.gmra.mxu0 %v1068
        %v1070 = vpop.f32.mrf.mxu0
        %v1071 = vadd.f32 %v988, %v1070
        %v1072 = vpop.f32.mrf.mxu0
        %1073 = vdwg.mxu0
        %1074 = vmatprep.subr.mxu0 0.0
        %1075 = vmatpush1.xpose.msra.mxu0 0.0
        %1076 = vmatprep.subr.mxu0 0.0
        %1077 = vmatpush1.xpose.msra.mxu0 0.0
        %1078 = vmatprep.subr.mxu0 0.0
        %1079 = vmatpush1.xpose.msra.mxu0 0.0
        %1080 = vmatprep.subr.mxu0 0.0
        %1081 = vmatpush1.xpose.msra.mxu0 0.0
        %1082 = vmatprep.subr.mxu0 0.0
        %1083 = vmatpush1.xpose.msra.mxu0 0.0
        %1084 = vmatprep.subr.mxu0 0.0
        %1085 = vmatpush1.xpose.msra.mxu0 0.0
        %1086 = vmatprep.subr.mxu0 0.0
        %1087 = vmatpush1.xpose.msra.mxu0 0.0
        %1088 = vmatprep.subr.mxu0 0.0
        %1089 = vmatpush1.xpose.msra.mxu0 0.0
        %1090 = vmatprep.subr.mxu0 0.0
        %1091 = vmatpush1.xpose.msra.mxu0 0.0
        %1092 = vmatprep.subr.mxu0 0.0
        %1093 = vmatpush1.xpose.msra.mxu0 0.0
        %1094 = vmatprep.subr.mxu0 0.0
        %1095 = vmatpush1.xpose.msra.mxu0 0.0
        %1096 = vmatprep.subr.mxu0 0.0
        %1097 = vmatpush1.xpose.msra.mxu0 0.0
        %1098 = vmatprep.subr.mxu0 0.0
        %1099 = vmatpush1.xpose.msra.mxu0 0.0
        %1100 = vmatprep.subr.mxu0 0.0
        %1101 = vmatpush1.xpose.msra.mxu0 0.0
        %1102 = vmatprep.subr.mxu0 0.0
        %v1103 = vand.u32 %v266, 4294901760
        %1104 = vmatpush1.xpose.msra.mxu0 %v1103
        %1105 = vmatprep.subr.mxu0 0.0
        %v1106 = vand.u32 %v263, 4294901760
        %1107 = vmatpush1.xpose.msra.mxu0 %v1106
        %1108 = vmatprep.subr.mxu0 0.0
        %1109 = vmatpush2.xpose.msra.mxu0 0.0
        %1110 = vmatprep.subr.mxu0 0.0
        %1111 = vmatpush2.xpose.msra.mxu0 0.0
        %1112 = vmatprep.subr.mxu0 0.0
        %1113 = vmatpush2.xpose.msra.mxu0 0.0
        %1114 = vmatprep.subr.mxu0 0.0
        %1115 = vmatpush2.xpose.msra.mxu0 0.0
        %1116 = vmatprep.subr.mxu0 0.0
        %1117 = vmatpush2.xpose.msra.mxu0 0.0
        %1118 = vmatprep.subr.mxu0 0.0
        %1119 = vmatpush2.xpose.msra.mxu0 0.0
        %1120 = vmatprep.subr.mxu0 0.0
        %1121 = vmatpush2.xpose.msra.mxu0 0.0
        %1122 = vmatprep.subr.mxu0 0.0
        %1123 = vmatpush2.xpose.msra.mxu0 0.0
        %1124 = vmatprep.subr.mxu0 0.0
        %1125 = vmatpush2.xpose.msra.mxu0 0.0
        %1126 = vmatprep.subr.mxu0 0.0
        %1127 = vmatpush2.xpose.msra.mxu0 0.0
        %1128 = vmatprep.subr.mxu0 0.0
        %1129 = vmatpush2.xpose.msra.mxu0 0.0
        %1130 = vmatprep.subr.mxu0 0.0
        %1131 = vmatpush2.xpose.msra.mxu0 0.0
        %1132 = vmatprep.subr.mxu0 0.0
        %1133 = vmatpush2.xpose.msra.mxu0 0.0
        %1134 = vmatprep.subr.mxu0 0.0
        %1135 = vmatpush2.xpose.msra.mxu0 0.0
        %1136 = vmatprep.subr.mxu0 0.0
        %1137 = vmatpush2.xpose.msra.mxu0 0.0
        %1138 = vmatprep.subr.mxu0 0.0
        %1139 = vmatpush2.xpose.msra.mxu0 0.0
        %1140 = vmatprep.mubr.f32.mxu0 0.0
        %v1141 = vand.u32 %v812, 4294901760
        %v1142 = vsub.f32 %v812, %v1141
        %v1143 = vand.u32 %v1142, 4294901760
        %1144 = vmatmul.mubr.f32.gmra.mxu0 %v1143
        %v1145 = vpop.f32.mrf.mxu0
        %v1146 = vadd.f32 %v1064, %v1145
        %v1147 = vpop.f32.mrf.mxu0
        %1148 = vmatprep.mubr.f32.mxu0 0.0
        %v1149 = vand.u32 %v815, 4294901760
        %v1150 = vsub.f32 %v815, %v1149
        %v1151 = vand.u32 %v1150, 4294901760
        %1152 = vmatmul.mubr.f32.gmra.mxu0 %v1151
        %v1153 = vpop.f32.mrf.mxu0
        %v1154 = vadd.f32 %v1071, %v1153
        %v1155 = vpop.f32.mrf.mxu0
        %1156 = vdwg.mxu0
        %1157 = vmatprep.subr.mxu0 0.0
        %1158 = vmatpush1.xpose.msra.mxu0 0.0
        %1159 = vmatprep.subr.mxu0 0.0
        %1160 = vmatpush1.xpose.msra.mxu0 0.0
        %1161 = vmatprep.subr.mxu0 0.0
        %1162 = vmatpush1.xpose.msra.mxu0 0.0
        %1163 = vmatprep.subr.mxu0 0.0
        %1164 = vmatpush1.xpose.msra.mxu0 0.0
        %1165 = vmatprep.subr.mxu0 0.0
        %1166 = vmatpush1.xpose.msra.mxu0 0.0
        %1167 = vmatprep.subr.mxu0 0.0
        %1168 = vmatpush1.xpose.msra.mxu0 0.0
        %1169 = vmatprep.subr.mxu0 0.0
        %1170 = vmatpush1.xpose.msra.mxu0 0.0
        %1171 = vmatprep.subr.mxu0 0.0
        %1172 = vmatpush1.xpose.msra.mxu0 0.0
        %1173 = vmatprep.subr.mxu0 0.0
        %1174 = vmatpush1.xpose.msra.mxu0 0.0
        %1175 = vmatprep.subr.mxu0 0.0
        %1176 = vmatpush1.xpose.msra.mxu0 0.0
        %1177 = vmatprep.subr.mxu0 0.0
        %1178 = vmatpush1.xpose.msra.mxu0 0.0
        %1179 = vmatprep.subr.mxu0 0.0
        %1180 = vmatpush1.xpose.msra.mxu0 0.0
        %1181 = vmatprep.subr.mxu0 0.0
        %1182 = vmatpush1.xpose.msra.mxu0 0.0
        %1183 = vmatprep.subr.mxu0 0.0
        %1184 = vmatpush1.xpose.msra.mxu0 0.0
        %1185 = vmatprep.subr.mxu0 0.0
        %v1186 = vand.u32 %v266, 4294901760
        %v1187 = vsub.f32 %v266, %v1186
        %v1188 = vand.u32 %v1187, 4294901760
        %1189 = vmatpush1.xpose.msra.mxu0 %v1188
        %1190 = vmatprep.subr.mxu0 0.0
        %v1191 = vand.u32 %v263, 4294901760
        %v1192 = vsub.f32 %v263, %v1191
        %v1193 = vand.u32 %v1192, 4294901760
        %1194 = vmatpush1.xpose.msra.mxu0 %v1193
        %1195 = vmatprep.subr.mxu0 0.0
        %1196 = vmatpush2.xpose.msra.mxu0 0.0
        %1197 = vmatprep.subr.mxu0 0.0
        %1198 = vmatpush2.xpose.msra.mxu0 0.0
        %1199 = vmatprep.subr.mxu0 0.0
        %1200 = vmatpush2.xpose.msra.mxu0 0.0
        %1201 = vmatprep.subr.mxu0 0.0
        %1202 = vmatpush2.xpose.msra.mxu0 0.0
        %1203 = vmatprep.subr.mxu0 0.0
        %1204 = vmatpush2.xpose.msra.mxu0 0.0
        %1205 = vmatprep.subr.mxu0 0.0
        %1206 = vmatpush2.xpose.msra.mxu0 0.0
        %1207 = vmatprep.subr.mxu0 0.0
        %1208 = vmatpush2.xpose.msra.mxu0 0.0
        %1209 = vmatprep.subr.mxu0 0.0
        %1210 = vmatpush2.xpose.msra.mxu0 0.0
        %1211 = vmatprep.subr.mxu0 0.0
        %1212 = vmatpush2.xpose.msra.mxu0 0.0
        %1213 = vmatprep.subr.mxu0 0.0
        %1214 = vmatpush2.xpose.msra.mxu0 0.0
        %1215 = vmatprep.subr.mxu0 0.0
        %1216 = vmatpush2.xpose.msra.mxu0 0.0
        %1217 = vmatprep.subr.mxu0 0.0
        %1218 = vmatpush2.xpose.msra.mxu0 0.0
        %1219 = vmatprep.subr.mxu0 0.0
        %1220 = vmatpush2.xpose.msra.mxu0 0.0
        %1221 = vmatprep.subr.mxu0 0.0
        %1222 = vmatpush2.xpose.msra.mxu0 0.0
        %1223 = vmatprep.subr.mxu0 0.0
        %1224 = vmatpush2.xpose.msra.mxu0 0.0
        %1225 = vmatprep.subr.mxu0 0.0
        %1226 = vmatpush2.xpose.msra.mxu0 0.0
        %1227 = vmatprep.mubr.f32.mxu0 0.0
        %v1228 = vand.u32 %v812, 4294901760
        %1229 = vmatmul.mubr.f32.gmra.mxu0 %v1228
        %v1230 = vpop.f32.mrf.mxu0
        %v1231 = vadd.f32 %v1146, %v1230
        %v1232 = vpop.f32.mrf.mxu0
        %1233 = vmatprep.mubr.f32.mxu0 0.0
        %v1234 = vand.u32 %v815, 4294901760
        %1235 = vmatmul.mubr.f32.gmra.mxu0 %v1234
        %v1236 = vpop.f32.mrf.mxu0
        %v1237 = vadd.f32 %v1154, %v1236
        %v1238 = vpop.f32.mrf.mxu0
        %1239 = vdwg.mxu0
        %1240 = vmatprep.subr.mxu0 0.0
        %1241 = vmatpush1.xpose.msra.mxu0 0.0
        %1242 = vmatprep.subr.mxu0 0.0
        %1243 = vmatpush1.xpose.msra.mxu0 0.0
        %1244 = vmatprep.subr.mxu0 0.0
        %1245 = vmatpush1.xpose.msra.mxu0 0.0
        %1246 = vmatprep.subr.mxu0 0.0
        %1247 = vmatpush1.xpose.msra.mxu0 0.0
        %1248 = vmatprep.subr.mxu0 0.0
        %1249 = vmatpush1.xpose.msra.mxu0 0.0
        %1250 = vmatprep.subr.mxu0 0.0
        %1251 = vmatpush1.xpose.msra.mxu0 0.0
        %1252 = vmatprep.subr.mxu0 0.0
        %1253 = vmatpush1.xpose.msra.mxu0 0.0
        %1254 = vmatprep.subr.mxu0 0.0
        %1255 = vmatpush1.xpose.msra.mxu0 0.0
        %1256 = vmatprep.subr.mxu0 0.0
        %1257 = vmatpush1.xpose.msra.mxu0 0.0
        %1258 = vmatprep.subr.mxu0 0.0
        %1259 = vmatpush1.xpose.msra.mxu0 0.0
        %1260 = vmatprep.subr.mxu0 0.0
        %1261 = vmatpush1.xpose.msra.mxu0 0.0
        %1262 = vmatprep.subr.mxu0 0.0
        %1263 = vmatpush1.xpose.msra.mxu0 0.0
        %1264 = vmatprep.subr.mxu0 0.0
        %1265 = vmatpush1.xpose.msra.mxu0 0.0
        %1266 = vmatprep.subr.mxu0 0.0
        %1267 = vmatpush1.xpose.msra.mxu0 0.0
        %1268 = vmatprep.subr.mxu0 0.0
        %v1269 = vand.u32 %v266, 4294901760
        %1270 = vmatpush1.xpose.msra.mxu0 %v1269
        %1271 = vmatprep.subr.mxu0 0.0
        %v1272 = vand.u32 %v263, 4294901760
        %1273 = vmatpush1.xpose.msra.mxu0 %v1272
        %1274 = vmatprep.subr.mxu0 0.0
        %1275 = vmatpush2.xpose.msra.mxu0 0.0
        %1276 = vmatprep.subr.mxu0 0.0
        %1277 = vmatpush2.xpose.msra.mxu0 0.0
        %1278 = vmatprep.subr.mxu0 0.0
        %1279 = vmatpush2.xpose.msra.mxu0 0.0
        %1280 = vmatprep.subr.mxu0 0.0
        %1281 = vmatpush2.xpose.msra.mxu0 0.0
        %1282 = vmatprep.subr.mxu0 0.0
        %1283 = vmatpush2.xpose.msra.mxu0 0.0
        %1284 = vmatprep.subr.mxu0 0.0
        %1285 = vmatpush2.xpose.msra.mxu0 0.0
        %1286 = vmatprep.subr.mxu0 0.0
        %1287 = vmatpush2.xpose.msra.mxu0 0.0
        %1288 = vmatprep.subr.mxu0 0.0
        %1289 = vmatpush2.xpose.msra.mxu0 0.0
        %1290 = vmatprep.subr.mxu0 0.0
        %1291 = vmatpush2.xpose.msra.mxu0 0.0
        %1292 = vmatprep.subr.mxu0 0.0
        %1293 = vmatpush2.xpose.msra.mxu0 0.0
        %1294 = vmatprep.subr.mxu0 0.0
        %1295 = vmatpush2.xpose.msra.mxu0 0.0
        %1296 = vmatprep.subr.mxu0 0.0
        %1297 = vmatpush2.xpose.msra.mxu0 0.0
        %1298 = vmatprep.subr.mxu0 0.0
        %1299 = vmatpush2.xpose.msra.mxu0 0.0
        %1300 = vmatprep.subr.mxu0 0.0
        %1301 = vmatpush2.xpose.msra.mxu0 0.0
        %1302 = vmatprep.subr.mxu0 0.0
        %1303 = vmatpush2.xpose.msra.mxu0 0.0
        %1304 = vmatprep.subr.mxu0 0.0
        %1305 = vmatpush2.xpose.msra.mxu0 0.0
        %1306 = vmatprep.mubr.f32.mxu0 0.0
        %v1307 = vand.u32 %v812, 4294901760
        %1308 = vmatmul.mubr.f32.gmra.mxu0 %v1307
        %v1309 = vpop.f32.mrf.mxu0
        %v1310 = vadd.f32 %v1231, %v1309
        %v1311 = vpop.f32.mrf.mxu0
        %1312 = vmatprep.mubr.f32.mxu0 0.0
        %v1313 = vand.u32 %v815, 4294901760
        %1314 = vmatmul.mubr.f32.gmra.mxu0 %v1313
        %v1315 = vpop.f32.mrf.mxu0
        %v1316 = vadd.f32 %v1237, %v1315
        %v1317 = vpop.f32.mrf.mxu0
        %1318 = vdwg.mxu0
        %s1319 = scalar_lea.vmem %s215, 16 [#allocation8]
        %1320 = vst.msk [vmem:[%s1319] sm:$0xff] %vm255, %v1310
        %1321 = vst.msk [vmem:[%s1319 + $0x8] sm:$0xff] %vm255, %v1316
        %v1322 = vsub.f32 %v777, %v1310
        %v1323 = vsub.f32 %v778, %v1316
        %s1324 = scalar_lea.vmem %s208, 16 [#allocation7]
        %1325 = vst.msk [vmem:[%s1324] sm:$0xff] %vm255, %v1322
        %1326 = vst.msk [vmem:[%s1324 + $0x8] sm:$0xff] %vm255, %v1323
        %s1327 = sand.u32 %s80, 1
        %s1328 = scalar_lea.sflag [#allocation4], %s1327
        %s1329 = sand.u32 %s80, 1
        %s1330 = smul.addr %s1329, 32
        %s1331 = scalar_lea.vmem [#allocation7], %s1330
        %s1332 = sand.u32 %s106, 1
        %s1333 = scalar_lea.sflag [#allocation9], %s1332
        %s1334 = sand.u32 %s106, 1
        %s1335 = smul.addr %s1334, 32
        %s1336 = scalar_lea.vmem [#allocation8], %s1335
        // Predicated region
        $region37: #{tpu_custom_call.1} parent=27 // pred_check
          %p1337 = pneg %p90
        $region38: #{tpu_custom_call.1} parent=27 // pred_check_branch
          %1339 = sbr.rel (%p1337) target = $region40
        $region39: #{tpu_custom_call.1} parent=27 // pred_region
          %s1340 = smul.u32 2, %s25
          %s1342 = ssub.s32 512, 512
          %1343 = vsyncadd %s1328, %s1342
          %s1344 = smul.addr %s1340, 2
          %s1345 = smul.addr %s1344, 128
          %s1346 = scalar_lea.hbm %s2, %s1345
          %s1347 = sshll.u32 %s1331, 4
          %s1348 = int_to_ptr.vmem [resolvable:$true] %s1347
          %1353 = dma.vmem_to_hbm [thread:$0]  %s1348, 512, %s1346, %s1328, 128, 128, 8
        $region40: #{tpu_custom_call.1} parent=27 // pred_fallthru
          _
        // Predicated region
        $region41: #{tpu_custom_call.1} parent=27 // pred_check
          %p1354 = pneg %p116
        $region42: #{tpu_custom_call.1} parent=27 // pred_check_branch
          %1356 = sbr.rel (%p1354) target = $region44
        $region43: #{tpu_custom_call.1} parent=27 // pred_region
          %s1357 = smul.u32 2, %s25
          %s1359 = ssub.s32 512, 512
          %1360 = vsyncadd %s1333, %s1359
          %s1361 = smul.addr %s1357, 2
          %s1362 = smul.addr %s1361, 128
          %s1363 = scalar_lea.hbm %s3, %s1362
          %s1364 = sshll.u32 %s1336, 4
          %s1365 = int_to_ptr.vmem [resolvable:$true] %s1364
          %1370 = dma.vmem_to_hbm [thread:$0]  %s1365, 512, %s1363, %s1333, 128, 128, 8
        $region44: #{tpu_custom_call.1} parent=27 // pred_fallthru
          _
      $region28: #{tpu_custom_call.1} parent=5 // pred_fallthru
        _
      %p1371 = scmp.le.s32.totalorder 2, %s20
      // Predicated region
      $region45: #{tpu_custom_call.1} parent=5 // pred_check
        %p1372 = pneg %p1371
      $region46: #{tpu_custom_call.1} parent=5 // pred_check_branch
        %1374 = sbr.rel (%p1372) target = $region48
      $region47: #{tpu_custom_call.1} parent=5 // pred_region
        %s1375 = ssub.s32 %s20, 2
        // Predicated region
        $region49: #{tpu_custom_call.1} parent=47 // pred_check
          %p1376 = pneg %p96
        $region50: #{tpu_custom_call.1} parent=47 // pred_check_branch
          %1378 = sbr.rel (%p1376) target = $region52
        $region51: #{tpu_custom_call.1} parent=47 // pred_region
          %s1379 = sand.u32 %s81, 1
          %s1380 = scalar_lea.sflag [#allocation4], %s1379
          %s1381 = sand.u32 %s81, 1
          %s1382 = smul.addr %s1381, 32
          %s1383 = scalar_lea.vmem [#allocation7], %s1382
          %1384 = dma.done %s1380, 512
        $region52: #{tpu_custom_call.1} parent=47 // pred_fallthru
          _
        // Predicated region
        $region53: #{tpu_custom_call.1} parent=47 // pred_check
          %p1385 = pneg %p122
        $region54: #{tpu_custom_call.1} parent=47 // pred_check_branch
          %1387 = sbr.rel (%p1385) target = $region56
        $region55: #{tpu_custom_call.1} parent=47 // pred_region
          %s1388 = sand.u32 %s107, 1
          %s1389 = scalar_lea.sflag [#allocation9], %s1388
          %s1390 = sand.u32 %s107, 1
          %s1391 = smul.addr %s1390, 32
          %s1392 = scalar_lea.vmem [#allocation8], %s1391
          %1393 = dma.done %s1389, 512
        $region56: #{tpu_custom_call.1} parent=47 // pred_fallthru
          _
      $region48: #{tpu_custom_call.1} parent=5 // pred_fallthru
        _
    $region6: #{tpu_custom_call.1} parent=1 // loop_footer
      %s24 = sadd.s32 1, %s20
    $region7: #{tpu_custom_call.1} parent=1 // loop_footer_branch
      %19 = sbr.rel target = $region3
    $region8: #{tpu_custom_call.1} parent=1 // loop_exit
      _
    %1394 = vsyncpa [#allocation3], 1
    %s1395 = scalar_lea.sflag [#allocation3], 1
    %1396 = vsyncpa %s1395, 1
    %1397 = vsyncpa [#allocation6], 1
    %s1398 = scalar_lea.sflag [#allocation6], 1
    %1399 = vsyncpa %s1398, 1
    %1400 = vsyncpa [#allocation4], 1
    %s1401 = scalar_lea.sflag [#allocation4], 1
    %1402 = vsyncpa %s1401, 1
    %1403 = vsyncpa [#allocation9], 1
    %s1404 = scalar_lea.sflag [#allocation9], 1
    %1405 = vsyncpa %s1404, 1

</llo_original>
